<compile_context>
chip_gen: v7x
topology: tpu7x:2x2x1
jax: 0.10.0
libtpu: 0.0.40
codegen_flags: <defaults>
</compile_context>

<pallas_src>
import functools

import jax
import jax.numpy as jnp
from jax import lax
from jax.experimental import pallas as pl
from jax.experimental.pallas import tpu as pltpu


def _round_up(v, m):
    return (v + m - 1) // m * m


def _p_stamps_loss_kernel(logits_ref, labels_ref, out_ref, *, beta, batch_size):
    i = pl.program_id(0)

    x = logits_ref[...].astype(jnp.float32)   # (TB, C)
    lbl = labels_ref[...]                     # (TB, 1) int32
    TB, C = x.shape

    # --- log-softmax pieces, numerically stable, one EUP exp pass over the tile ---
    m = jnp.max(x, axis=1, keepdims=True)
    s = x - m
    e = jnp.exp(s)                                      # single exp over the tile
    denom = jnp.sum(e, axis=1, keepdims=True)           # (TB, 1)
    lse = jnp.log(denom)                                # (TB, 1)

    # --- hard-label CE: ce_hard = lse - s[label] (labels precomputed in wrapper) ---
    iota = lax.broadcasted_iota(jnp.int32, (TB, C), 1)
    s_sel = jnp.sum(jnp.where(iota == lbl, s, 0.0), axis=1, keepdims=True)  # (TB, 1)
    ce_hard = lse - s_sel

    # --- soft-label CE with p = softmax(logits):
    #     -sum(p * log_soft) = lse - sum(e*s)/denom   (since sum(p) == 1) ---
    es_sum = jnp.sum(e * s, axis=1, keepdims=True)
    ce_soft = lse - es_sum / denom

    per_row = ce_hard - jnp.float32(beta) * ce_soft      # (TB, 1)

    # mask batch-tail rows (block may overrun B; where-select keeps garbage/NaN out)
    row = lax.broadcasted_iota(jnp.int32, (TB, 1), 0) + i * TB
    per_row = jnp.where(row < batch_size, per_row, 0.0)
    tile_sum = jnp.sum(per_row)

    # Write this tile's partial sum into its own aligned (8, 128) output block
    # (value at [0, 0], zeros elsewhere) so the grid axis carries no state and
    # can be marked "parallel" (uses both TensorCores on v7x).
    r8 = lax.broadcasted_iota(jnp.int32, (8, 128), 0)
    l8 = lax.broadcasted_iota(jnp.int32, (8, 128), 1)
    out_ref[...] = jnp.where((r8 == 0) & (l8 == 0), tile_sum, 0.0)


def p_stamps_loss(logits, targets, beta):
    B, C = logits.shape

    # argmax(targets, dim=1) — first-occurrence tie-break, matching torch.argmax.
    # Doing it here (plain XLA) lets the kernel read B*4 bytes of labels instead of
    # the dense B*C*4 targets stream (~2x less kernel HBM traffic).
    labels = jnp.argmax(targets, axis=1).astype(jnp.int32).reshape(B, 1)

    # --- tile sizing with lane-padded (8, 128) footprints, generation-aware ---
    C_pad = _round_up(C, 128)
    try:
        vmem_cap = int(pltpu.get_tpu_info().vmem_capacity_bytes)
    except Exception:
        vmem_cap = 64 * 1024 * 1024  # conservative (v7x per-TC VMEM)

    # Budget for the 2 inputs x 2 pipeline buffers: ~half of physical VMEM
    # (v7x: 32 MiB of 64; v5e/v6e: 64 MiB of 128). Leaves headroom for scratch/output.
    pipeline_budget = vmem_cap // 2
    per_row_bytes = 4 * (C_pad + 128)        # padded logits row + padded labels row
    rows_budget = max(8, (pipeline_budget // (2 * per_row_bytes)) // 8 * 8)

    if B <= rows_budget:
        TB = B                               # block == full array dim: always legal
        num_tiles = 1
    else:
        TB = rows_budget                     # multiple of 8
        num_tiles = (B + TB - 1) // TB

    padded_rows = _round_up(TB, 8)
    per_buffer_set = padded_rows * C_pad * 4 + padded_rows * 128 * 4
    vmem_limit = int(min(vmem_cap, 2 * per_buffer_set + (16 << 20)))

    # TODO(synk): add a class-axis grid dimension (online-softmax accumulation of
    # running max / sum(e) / sum(e*s)) for very large C, and a wrapper-side lane
    # repack for tiny C (e.g. C=16) to avoid 8x lane padding of each vreg.

    kernel = functools.partial(_p_stamps_loss_kernel, beta=float(beta), batch_size=B)
    partial_sums = pl.pallas_call(
        kernel,
        out_shape=jax.ShapeDtypeStruct((8 * num_tiles, 128), jnp.float32),
        grid=(num_tiles,),
        in_specs=[
            pl.BlockSpec((TB, C), lambda i: (i, 0)),
            pl.BlockSpec((TB, 1), lambda i: (i, 0)),
        ],
        out_specs=pl.BlockSpec((8, 128), lambda i: (i, 0)),
        compiler_params=pltpu.CompilerParams(
            dimension_semantics=("parallel",),
            vmem_limit_bytes=vmem_limit,
        ),
        cost_estimate=pl.CostEstimate(
            flops=8 * B * C,
            transcendentals=B * C + 2 * B,
            bytes_accessed=B * C * 4 + B * 4 + num_tiles * 8 * 128 * 4,
        ),
    )(logits, labels)

    return jnp.sum(partial_sums) / jnp.float32(B)


if __name__ == "__main__":
    batch_size = 8
    num_classes = 16
    beta = 0.5

    key = jax.random.PRNGKey(0)
    k1, k2 = jax.random.split(key)
    logits = jax.random.normal(k1, (batch_size, num_classes), dtype=jnp.float32)
    # one-hot-like targets (the module takes argmax over dim=1)
    labels = jax.random.randint(k2, (batch_size,), 0, num_classes)
    targets = jax.nn.one_hot(labels, num_classes, dtype=jnp.float32)

    loss = p_stamps_loss(logits, targets, beta)
    jax.block_until_ready(loss)

    # Plain-JAX reference check (same math, outside the kernel)
    log_soft = jax.nn.log_softmax(logits, axis=1)
    ref1 = -jnp.mean(jnp.take_along_axis(log_soft, jnp.argmax(targets, 1)[:, None], 1))
    p = jnp.exp(log_soft)
    ref2 = -jnp.mean(jnp.sum(p * log_soft, axis=1))
    ref = ref1 - beta * ref2
    assert jnp.allclose(loss, ref, atol=1e-5, rtol=1e-5), (loss, ref)

    print("KERNEL_OK")
</pallas_src>

<mosaic_0001>
module attributes {stable_mosaic.version = 11 : i64} {
  func.func @_p_stamps_loss_kernel(%arg0: i32, %arg1: memref<8x16xf32, #tpu.memory_space<vmem>>, %arg2: memref<8x1xi32, #tpu.memory_space<vmem>>, %arg3: memref<8x128xf32, #tpu.memory_space<vmem>>) attributes {dimension_semantics = [#tpu.dimension_semantics<parallel>], iteration_bounds = array<i64: 1>, scalar_prefetch = 0 : i64, scratch_operands = 0 : i64, tpu.core_type = #tpu.core_type<tc>, window_params = [{transform_indices = @transform_0, window_bounds = array<i64: 8, 16>}, {transform_indices = @transform_1, window_bounds = array<i64: 8, 1>}, {transform_indices = @transform_2, window_bounds = array<i64: 8, 128>}]} {
    %c0 = arith.constant 0 : index
    %c0_0 = arith.constant 0 : index
    %0 = vector.load %arg1[%c0, %c0_0] : memref<8x16xf32, #tpu.memory_space<vmem>>, vector<8x16xf32>
    %c0_1 = arith.constant 0 : index
    %c0_2 = arith.constant 0 : index
    %1 = vector.load %arg2[%c0_1, %c0_2] : memref<8x1xi32, #tpu.memory_space<vmem>>, vector<8x1xi32>
    %cst = arith.constant dense<0xFF800000> : vector<8xf32>
    %2 = vector.multi_reduction <maximumf>, %0, %cst [1] : vector<8x16xf32> to vector<8xf32>
    %3 = vector.shape_cast %2 : vector<8xf32> to vector<8x1xf32>
    %4 = vector.broadcast %3 : vector<8x1xf32> to vector<8x16xf32>
    %5 = arith.subf %0, %4 : vector<8x16xf32>
    %6 = math.exp %5 : vector<8x16xf32>
    %cst_3 = arith.constant dense<0.000000e+00> : vector<8xf32>
    %7 = vector.multi_reduction <add>, %6, %cst_3 [1] : vector<8x16xf32> to vector<8xf32>
    %8 = vector.shape_cast %7 : vector<8xf32> to vector<8x1xf32>
    %9 = math.log %8 : vector<8x1xf32>
    %10 = tpu.iota {dimensions = array<i32: 1>} : vector<8x16xi32>
    %11 = vector.broadcast %1 : vector<8x1xi32> to vector<8x16xi32>
    %12 = arith.cmpi eq, %10, %11 : vector<8x16xi32>
    %cst_4 = arith.constant 0.000000e+00 : f32
    %13 = vector.broadcast %cst_4 : f32 to vector<8x16xf32>
    %14 = arith.select %12, %5, %13 : vector<8x16xi1>, vector<8x16xf32>
    %cst_5 = arith.constant dense<0.000000e+00> : vector<8xf32>
    %15 = vector.multi_reduction <add>, %14, %cst_5 [1] : vector<8x16xf32> to vector<8xf32>
    %16 = vector.shape_cast %15 : vector<8xf32> to vector<8x1xf32>
    %17 = arith.subf %9, %16 : vector<8x1xf32>
    %18 = arith.mulf %6, %5 : vector<8x16xf32>
    %cst_6 = arith.constant dense<0.000000e+00> : vector<8xf32>
    %19 = vector.multi_reduction <add>, %18, %cst_6 [1] : vector<8x16xf32> to vector<8xf32>
    %20 = vector.shape_cast %19 : vector<8xf32> to vector<8x1xf32>
    %21 = arith.divf %20, %8 : vector<8x1xf32>
    %22 = arith.subf %9, %21 : vector<8x1xf32>
    %cst_7 = arith.constant 5.000000e-01 : f32
    %23 = vector.broadcast %cst_7 : f32 to vector<8x1xf32>
    %24 = arith.mulf %23, %22 : vector<8x1xf32>
    %25 = arith.subf %17, %24 : vector<8x1xf32>
    %26 = tpu.iota {dimensions = array<i32: 0>} : vector<8x1xi32>
    %c8_i32 = arith.constant 8 : i32
    %27 = arith.muli %arg0, %c8_i32 : i32
    %28 = vector.broadcast %27 : i32 to vector<8x1xi32>
    %29 = arith.addi %26, %28 : vector<8x1xi32>
    %c8_i32_8 = arith.constant 8 : i32
    %30 = vector.broadcast %c8_i32_8 : i32 to vector<8x1xi32>
    %31 = arith.cmpi slt, %29, %30 : vector<8x1xi32>
    %cst_9 = arith.constant 0.000000e+00 : f32
    %32 = vector.broadcast %cst_9 : f32 to vector<8x1xf32>
    %33 = arith.select %31, %25, %32 : vector<8x1xi1>, vector<8x1xf32>
    %34 = vector.shape_cast %33 : vector<8x1xf32> to vector<1x8x1xf32>
    %cst_10 = arith.constant dense<0.000000e+00> : vector<1xf32>
    %35 = vector.multi_reduction <add>, %34, %cst_10 [1, 2] : vector<1x8x1xf32> to vector<1xf32>
    %36 = vector.shape_cast %35 : vector<1xf32> to vector<1x1x1xf32>
    %37 = vector.extract %36[0, 0, 0] : f32 from vector<1x1x1xf32>
    %38 = tpu.iota {dimensions = array<i32: 0>} : vector<8x128xi32>
    %39 = tpu.iota {dimensions = array<i32: 1>} : vector<8x128xi32>
    %c0_i32 = arith.constant 0 : i32
    %40 = vector.broadcast %c0_i32 : i32 to vector<8x128xi32>
    %41 = arith.cmpi eq, %38, %40 : vector<8x128xi32>
    %c0_i32_11 = arith.constant 0 : i32
    %42 = vector.broadcast %c0_i32_11 : i32 to vector<8x128xi32>
    %43 = arith.cmpi eq, %39, %42 : vector<8x128xi32>
    %44 = arith.andi %41, %43 : vector<8x128xi1>
    %cst_12 = arith.constant 0.000000e+00 : f32
    %45 = vector.broadcast %37 : f32 to vector<8x128xf32>
    %46 = vector.broadcast %cst_12 : f32 to vector<8x128xf32>
    %47 = arith.select %44, %45, %46 : vector<8x128xi1>, vector<8x128xf32>
    %c0_13 = arith.constant 0 : index
    %c0_14 = arith.constant 0 : index
    %48 = vector.load %arg3[%c0_13, %c0_14] : memref<8x128xf32, #tpu.memory_space<vmem>>, vector<8x128xf32>
    tpu.vector_store %arg3[%c0_13, %c0_14], %47 {strides = array<i32>} : memref<8x128xf32, #tpu.memory_space<vmem>>, vector<8x128xf32>,
    return
  }
  func.func @transform_0(%arg0: i32) -> (i32, i32) {
    %c0_i32 = arith.constant 0 : i32
    %c0_i32_0 = arith.constant 0 : i32
    return %arg0, %c0_i32 : i32, i32
  }
  func.func @transform_1(%arg0: i32) -> (i32, i32) {
    %c0_i32 = arith.constant 0 : i32
    %c0_i32_0 = arith.constant 0 : i32
    return %arg0, %c0_i32 : i32, i32
  }
  func.func @transform_2(%arg0: i32) -> (i32, i32) {
    %c0_i32 = arith.constant 0 : i32
    %c0_i32_0 = arith.constant 0 : i32
    return %arg0, %c0_i32 : i32, i32
  }
}

</mosaic_0001>

<llo_original>
// kernel: tpu_custom_call.1
$region0: #{tpu_custom_call.1}
  #allocation0 [shape = 'u32[]', space=smem, size = 0x4, offset = 0x4, fixed_abs, tag = 'smem constant byte address 0x4 - core index']
  #allocation1 [shape = 'u32[144,128]{1,0:T(1,128)}', space=vmem, size = 0x12000, scoped, tag = 'internal scratch']
  %s0 = inlined_call_operand.vmem [shape: f32[8,16], index: 0, kind: input, shape index: {}]
  %s1 = inlined_call_operand.vmem [shape: s32[8,1], index: 1, kind: input, shape index: {}]
  %s2 = inlined_call_operand.hbm [shape: f32[8,128], index: 2, kind: output, shape index: {}]
  %s3 = sld [smem:[#allocation0]]
  $region18: #{tpu_custom_call.1} parent=0
    _
  %s5 = ssub.s32 1, %s3
  %s6 = scalar_select 0, %s5, %s3
  $region1: #{tpu_custom_call.1} parent=0
    #allocation2 [shape = 'u8[4096]{0}', space=vmem, size = 0x1000, scoped, tag = 'output window, operand 0, single buffered']
    #allocation3 [shape = 's32[1]{0}', space=sflag, size = 0x4, scoped, tag = 'scoped memory for tpu_custom_call.1']
    %7 = vsyncpa [#allocation3], 0
    // Predicated region
    $region2: #{tpu_custom_call.1} parent=1 // pred_check
      _
    $region3: #{tpu_custom_call.1} parent=1 // pred_check_branch
      %9 = sbr.rel (0) target = $region5
    $region4: #{tpu_custom_call.1} parent=1 // pred_region
      _
    $region5: #{tpu_custom_call.1} parent=1 // pred_fallthru
      _
    // Predicated region
    $region6: #{tpu_custom_call.1} parent=1 // pred_check
      _
    $region7: #{tpu_custom_call.1} parent=1 // pred_check_branch
      %11 = sbr.rel (0) target = $region9
    $region8: #{tpu_custom_call.1} parent=1 // pred_region
      _
    $region9: #{tpu_custom_call.1} parent=1 // pred_fallthru
      _
    %v12 = vld [vmem:[%s0] sm:$0xff]
    %v13 = vld [vmem:[%s1] sm:$0xff]
    %vm14 = vcmask 130048
    %v15 = vsel %vm14, %v12, -inf
    %16 = vmax.xlane.f32.xlu0 %v15
    %v17 = vpop.xlane.xlu0 %16
    %v18 = vsub.f32 %v12, %v17
    %v19 = vmul.f32 %v18, 1.442695
    %v20 = vpow.pop %v19
    %v21 = vsel %vm14, %v20, 0.0
    %22 = vadd.xlane.f32.xlu0 %v21
    %v23 = vpop.xlane.xlu0 %22
    %v24 = vlog2.pop %v23
    %v25 = vmul.f32 %v24, 0.6931472
    %v26 = vlaneseq
    %v27 = vand.u32 %v26, 127
    %28 = vset.pattern.permute.xlu0 0
    %29 = vperm.xlu0 %28, %v13
    %v30 = vpop.permute.xlu0 %29
    %vm31 = vcmp.eq.s32.totalorder %v27, %v30
    %v32 = vsel %vm31, %v18, 0.0
    %v33 = vsel %vm14, %v32, 0.0
    %34 = vadd.xlane.f32.xlu0 %v33
    %v35 = vpop.xlane.xlu0 %34
    %v36 = vsub.f32 %v25, %v35
    %v37 = vmul.f32 %v20, %v18
    %v38 = vsel %vm14, %v37, 0.0
    %39 = vadd.xlane.f32.xlu0 %v38
    %v40 = vpop.xlane.xlu0 %39
    %v41 = vrcp.pop %v23
    %v42 = vmul.f32 %v40, %v41
    %v43 = vsub.f32 %v25, %v42
    %v44 = vmul.f32 %v43, 0.5
    %v45 = vsub.f32 %v36, %v44
    %v46 = vlaneseq
    %v47 = vshrl.u32 %v46, 7
    %s48 = smul.u32 0, 8
    %v49 = vstv %s48
    %v50 = vadd.s32 %v47, %v49
    %vm51 = vcmp.lt.s32.totalorder %v50, 8
    %v52 = vsel %vm51, %v45, 0.0
    %vm53 = vcmask 7168
    %v54 = vsel %vm53, %v52, 0.0
    %55 = vadd.xlane.f32.xlu0 %v54
    %v56 = vpop.xlane.xlu0 %55
    %v57 = vrot.slane %v56, 4
    %v58 = vadd.f32 %v56, %v57
    %v59 = vrot.slane %v58, 2
    %v60 = vadd.f32 %v58, %v59
    %v61 = vrot.slane %v60, 1
    %v62 = vadd.f32 %v60, %v61
    %s63 = vtos %v62
    %vm64 = vcmp.eq.s32.totalorder %v47, 0
    %vm65 = vcmp.eq.s32.totalorder %v27, 0
    %vm66 = vmand %vm64, %vm65
    %v67 = vstv %s63
    %v68 = vsel %vm66, %v67, 0.0
    %69 = vst [vmem:[#allocation2] sm:$0xff] %v68
    // Predicated region
    $region10: #{tpu_custom_call.1} parent=1 // pred_check
      _
    $region11: #{tpu_custom_call.1} parent=1 // pred_check_branch
      %71 = sbr.rel (0) target = $region13
    $region12: #{tpu_custom_call.1} parent=1 // pred_region
      %s73 = ssub.s32 128, 128
      %74 = vsyncadd [#allocation3], %s73
      %s76 = sshll.u32 [#allocation2], 4
      %s77 = int_to_ptr.vmem [resolvable:$true] %s76
      %79 = dma.vmem_to_hbm [thread:$0]  %s77, 128, %s2, [#allocation3]
    $region13: #{tpu_custom_call.1} parent=1 // pred_fallthru
      _
    // Predicated region
    $region14: #{tpu_custom_call.1} parent=1 // pred_check
      _
    $region15: #{tpu_custom_call.1} parent=1 // pred_check_branch
      %81 = sbr.rel (0) target = $region17
    $region16: #{tpu_custom_call.1} parent=1 // pred_region
      %82 = dma.done [#allocation3], 128
    $region17: #{tpu_custom_call.1} parent=1 // pred_fallthru
      _
    %83 = vsyncpa [#allocation3], 1

</llo_original>
